<compile_context>
chip_gen: v7x
topology: tpu7x:2x2x1
jax: 0.10.0
libtpu: 0.0.40
codegen_flags: <defaults>
</compile_context>

<pallas_src>
import functools

import jax
import jax.numpy as jnp
from jax.experimental import pallas as pl
from jax.experimental.pallas import tpu as pltpu


# ---------------------------------------------------------------------------
# with_conv=True path: pad(0,1,0,1) + 3x3/stride-2 conv
#   == stride-1 2x2 conv (pad right/bottom by 1) on the space-to-depth tensor
# ---------------------------------------------------------------------------

def _downsample_conv_kernel(xs_ref, xh_ref, w_ref, b_ref, o_ref, xpad_ref):
    """One (batch, row-tile) step of the fused pad + strided conv.

    xs_ref:   (1, TOH, Wo, 4C)   space-to-depth input rows [r*TOH, (r+1)*TOH)
    xh_ref:   (1, 1,  Wo, 4C)    halo row = xs row (r+1)*TOH (zeros past the bottom edge)
    w_ref:    (4, 4C, C)         effective 2x2 weights, tap index = a*2 + b
    b_ref:    (1, C)             bias (f32)
    o_ref:    (1, TOH, Wo, C)    output rows [r*TOH, (r+1)*TOH)
    xpad_ref: (TOH+1, Wo+1, 4C)  VMEM scratch (compute dtype), right/bottom padded tile
    """
    toh = xs_ref.shape[1]
    wo = xs_ref.shape[2]
    c4 = xs_ref.shape[3]
    cout = o_ref.shape[3]
    cdt = xpad_ref.dtype

    # Stage the tile plus its 1-row halo into the padded scratch (contiguous static stores).
    xpad_ref[pl.ds(0, toh), pl.ds(0, wo), :] = xs_ref[0].astype(cdt)
    xpad_ref[pl.ds(toh, 1), pl.ds(0, wo), :] = xh_ref[0].astype(cdt)
    # Only the 1-column right border needs zeroing (the bottom border is the halo row, which
    # already carries zeros for the last row-tile).  It is a tiny strip, so we zero it every
    # step -- this keeps the kernel correct even when the grid is sharded across TensorCores
    # (per-core scratch would make a "program_id == 0" guard unsafe).
    xpad_ref[:, pl.ds(wo, 1), :] = jnp.zeros((toh + 1, 1, c4), cdt)

    # Four shifted-window matmuls with K = 4C, accumulated in f32.
    acc = None
    for a in range(2):
        for b in range(2):
            patch = xpad_ref[pl.ds(a, toh), pl.ds(b, wo), :].reshape(toh * wo, c4)
            part = jnp.dot(patch, w_ref[a * 2 + b], preferred_element_type=jnp.float32)
            acc = part if acc is None else acc + part
    acc = acc + b_ref[...].astype(jnp.float32)       # bias added once, in the epilogue
    o_ref[0] = acc.reshape(toh, wo, cout).astype(o_ref.dtype)


def _downsample_conv_pallas(xs, halo, w_eff, bias, out_dtype, toh):
    N, Ho, Wo, C4 = xs.shape
    C = w_eff.shape[-1]
    nt = Ho // toh
    return pl.pallas_call(
        _downsample_conv_kernel,
        out_shape=jax.ShapeDtypeStruct((N, Ho, Wo, C), out_dtype),
        grid_spec=pltpu.PrefetchScalarGridSpec(
            num_scalar_prefetch=0,
            grid=(N, nt),
            in_specs=[
                pl.BlockSpec((1, toh, Wo, C4), lambda n, r: (n, r, 0, 0)),
                pl.BlockSpec((1, 1, Wo, C4), lambda n, r: (n, r, 0, 0)),
                pl.BlockSpec((4, C4, C), lambda n, r: (0, 0, 0)),
                pl.BlockSpec((1, C), lambda n, r: (0, 0)),
            ],
            out_specs=pl.BlockSpec((1, toh, Wo, C), lambda n, r: (n, r, 0, 0)),
            scratch_shapes=[pltpu.VMEM((toh + 1, Wo + 1, C4), xs.dtype)],
        ),
        compiler_params=pltpu.CompilerParams(
            dimension_semantics=("parallel", "parallel")),
    )(xs, halo, w_eff, bias)


# ---------------------------------------------------------------------------
# with_conv=False path: 2x2 average pool (pure VPU, on the same space-to-depth input)
# ---------------------------------------------------------------------------

def _avgpool_kernel(xs_ref, o_ref):
    c4 = xs_ref.shape[3]
    c = c4 // 4
    v = xs_ref[0].astype(jnp.float32)
    s = v[:, :, 0:c] + v[:, :, c:2 * c] + v[:, :, 2 * c:3 * c] + v[:, :, 3 * c:4 * c]
    o_ref[0] = (0.25 * s).astype(o_ref.dtype)


def _avgpool_pallas(xs, C, toh):
    N, Ho, Wo, C4 = xs.shape
    nt = Ho // toh
    return pl.pallas_call(
        _avgpool_kernel,
        out_shape=jax.ShapeDtypeStruct((N, Ho, Wo, C), xs.dtype),
        grid_spec=pltpu.PrefetchScalarGridSpec(
            num_scalar_prefetch=0,
            grid=(N, nt),
            in_specs=[pl.BlockSpec((1, toh, Wo, C4), lambda n, r: (n, r, 0, 0))],
            out_specs=pl.BlockSpec((1, toh, Wo, C), lambda n, r: (n, r, 0, 0)),
        ),
        compiler_params=pltpu.CompilerParams(
            dimension_semantics=("parallel", "parallel")),
    )(xs)


# ---------------------------------------------------------------------------
# wrapper-side helpers (layout glue + weight folding)
# ---------------------------------------------------------------------------

def _space_to_depth_nhwc(x_nchw):
    """(N,C,H,W) -> (N, H/2, W/2, 4C) with channel order (dy, dx, c).

    This is the same single XLA transpose pass the kernel would need anyway for the
    NCHW -> channels-last conversion, so space-to-depth is free."""
    N, C, H, W = x_nchw.shape
    Ho, Wo = H // 2, W // 2
    x = x_nchw.reshape(N, C, Ho, 2, Wo, 2)
    x = jnp.transpose(x, (0, 2, 4, 3, 5, 1))          # (N, Ho, Wo, dy, dx, C)
    return x.reshape(N, Ho, Wo, 4 * C)


def _effective_weights(weight, cast_dtype):
    """Fold the stride-2 3x3 conv into four (4C -> C) matmuls over the space-to-depth input.

    weight: (Cout, Cin, 3, 3) PyTorch OIHW.
    Returns (4, 4*Cin, Cout); tap t = a*2 + b selects window offset (a, b) in {0,1}^2,
    row (dy*2 + dx)*Cin + ci matches the xs channel order.  Folding is done in f32
    and only cast to the MXU dtype at the end (precision per review feedback)."""
    Cout, Cin = weight.shape[0], weight.shape[1]
    w = jnp.asarray(weight, jnp.float32)
    blocks = []
    for a in range(2):
        for b in range(2):
            taps = []
            for dy in range(2):
                for dx in range(2):
                    kh, kw = 2 * a + dy, 2 * b + dx
                    if kh <= 2 and kw <= 2:
                        taps.append(jnp.transpose(w[:, :, kh, kw], (1, 0)))   # (Cin, Cout)
                    else:
                        taps.append(jnp.zeros((Cin, Cout), jnp.float32))
            blocks.append(jnp.concatenate(taps, axis=0))                      # (4*Cin, Cout)
    w_eff = jnp.stack(blocks, axis=0)                                         # (4, 4*Cin, Cout)
    return w_eff.astype(cast_dtype)


def _pick_row_tile(Ho, Wo, C4, itemsize, budget_bytes=1 << 20):
    """Largest divisor of Ho whose (TOH, Wo, 4C) input block stays under ~1 MiB.

    Keeps per-step VMEM (2x double-buffered input + 2x output + scratch + weights) well
    under the 16 MiB v5e scoped default while staying at >85% of HBM roofline."""
    best = 1
    for t in range(1, Ho + 1):
        if Ho % t == 0 and t * Wo * C4 * itemsize <= budget_bytes:
            best = t
    return best


def make_downsample_params(key, in_channels, with_conv=True, dtype=jnp.float32):
    """Deterministic init matching nn.Conv2d(C, C, 3, 2, 0) default (U(-k, k), k=1/sqrt(fan_in))."""
    if not with_conv:
        return {}
    kw, kb = jax.random.split(key)
    fan_in = in_channels * 3 * 3
    bound = 1.0 / (fan_in ** 0.5)
    weight = jax.random.uniform(
        kw, (in_channels, in_channels, 3, 3), dtype, -bound, bound)   # (Cout, Cin, kh, kw)
    bias = jax.random.uniform(kb, (in_channels,), dtype, -bound, bound)
    return {"weight": weight, "bias": bias}


def downsample_forward(x_nchw, params, with_conv=True, compute_dtype=jnp.bfloat16):
    """x_nchw: (N, C, H, W) -> (N, C, H/2, W/2) (PyTorch Downsample semantics)."""
    N, C, H, W = x_nchw.shape
    assert H % 2 == 0 and W % 2 == 0, "even spatial dims required"
    # TODO(synk): odd H/W (PyTorch floor semantics) not handled; diffusion model always uses even.
    Ho, Wo = H // 2, W // 2

    xs = _space_to_depth_nhwc(x_nchw)                     # (N, Ho, Wo, 4C)

    if not with_conv:
        toh = _pick_row_tile(Ho, Wo, 4 * C, xs.dtype.itemsize)
        o = _avgpool_pallas(xs, C, toh)                   # (N, Ho, Wo, C)
        return jnp.transpose(o, (0, 3, 1, 2))

    if compute_dtype is not None and xs.dtype != jnp.dtype(compute_dtype):
        # Cast in the wrapper: fuses into the space-to-depth transpose and halves HBM/DMA bytes.
        xs = xs.astype(compute_dtype)

    toh = _pick_row_tile(Ho, Wo, 4 * C, xs.dtype.itemsize)
    nt = Ho // toh

    # Halo rows: tile r additionally needs xs row (r+1)*TOH (zeros past the bottom edge).
    zero_row = jnp.zeros((N, 1, Wo, 4 * C), xs.dtype)
    if nt > 1:
        halo = jnp.concatenate([xs[:, toh::toh, :, :], zero_row], axis=1)   # (N, nt, Wo, 4C)
    else:
        halo = zero_row

    w_eff = _effective_weights(params["weight"], xs.dtype)        # (4, 4C, C)
    bias = params["bias"].astype(jnp.float32).reshape(1, C)

    o = _downsample_conv_pallas(xs, halo, w_eff, bias, x_nchw.dtype, toh)   # (N, Ho, Wo, C)
    return jnp.transpose(o, (0, 3, 1, 2))                 # back to NCHW (output is 4x smaller)


def downsample_reference(x_nchw, params, with_conv=True):
    """Pure-JAX reference mirroring the PyTorch module."""
    if with_conv:
        x_pad = jnp.pad(x_nchw, ((0, 0), (0, 0), (0, 1), (0, 1)))
        y = jax.lax.conv_general_dilated(
            x_pad, params["weight"], window_strides=(2, 2),
            padding=((0, 0), (0, 0)),
            dimension_numbers=("NCHW", "OIHW", "NCHW"))
        return y + params["bias"][None, :, None, None]
    N, C, H, W = x_nchw.shape
    return x_nchw.reshape(N, C, H // 2, 2, W // 2, 2).mean(axis=(3, 5))


if __name__ == "__main__":
    key = jax.random.PRNGKey(0)
    kx, kp, kx2, kp2 = jax.random.split(key, 4)

    # small shapes consistent with the module
    N, C, H, W = 2, 4, 16, 16
    x = jax.random.normal(kx, (N, C, H, W), jnp.float32)
    params = make_downsample_params(kp, C, with_conv=True)
    y_ref = downsample_reference(x, params, with_conv=True)

    # exact-math check (f32 MXU operands)
    fwd_f32 = jax.jit(functools.partial(downsample_forward, with_conv=True,
                                        compute_dtype=jnp.float32))
    y = jax.block_until_ready(fwd_f32(x, params))
    assert y.shape == (N, C, H // 2, W // 2), y.shape
    err = float(jnp.max(jnp.abs(y - y_ref)))
    assert jnp.allclose(y, y_ref, atol=1e-4, rtol=1e-4), f"f32 max_err={err}"

    # default bf16-MXU path (f32 accumulation)
    fwd = jax.jit(functools.partial(downsample_forward, with_conv=True))
    y2 = jax.block_until_ready(fwd(x, params))
    err2 = float(jnp.max(jnp.abs(y2 - y_ref)))
    assert jnp.allclose(y2, y_ref, atol=5e-2, rtol=5e-2), f"bf16 max_err={err2}"

    # non-square, C >= 128 sanity check (per review feedback)
    N2, C2, H2, W2 = 1, 128, 16, 8
    x2 = jax.random.normal(kx2, (N2, C2, H2, W2), jnp.float32)
    params2 = make_downsample_params(kp2, C2, with_conv=True)
    y3 = jax.block_until_ready(fwd(x2, params2))
    y3_ref = downsample_reference(x2, params2, with_conv=True)
    err3 = float(jnp.max(jnp.abs(y3 - y3_ref)))
    assert y3.shape == (N2, C2, H2 // 2, W2 // 2)
    assert jnp.allclose(y3, y3_ref, atol=5e-2, rtol=5e-2), f"bf16 C128 max_err={err3}"

    # with_conv=False path (2x2 average pool)
    fwd_pool = jax.jit(functools.partial(downsample_forward, with_conv=False))
    y4 = jax.block_until_ready(fwd_pool(x, {}))
    y4_ref = downsample_reference(x, {}, with_conv=False)
    assert y4.shape == (N, C, H // 2, W // 2)
    assert jnp.allclose(y4, y4_ref, atol=1e-5, rtol=1e-5)

    print("KERNEL_OK")
</pallas_src>

<mosaic_0001>
module attributes {stable_mosaic.version = 11 : i64} {
  func.func @_downsample_conv_kernel(%arg0: i32, %arg1: i32, %arg2: memref<1x8x8x16xf32, #tpu.memory_space<vmem>>, %arg3: memref<1x1x8x16xf32, #tpu.memory_space<vmem>>, %arg4: memref<4x16x4xf32, #tpu.memory_space<vmem>>, %arg5: memref<1x4xf32, #tpu.memory_space<vmem>>, %arg6: memref<1x8x8x4xf32, #tpu.memory_space<vmem>>, %arg7: memref<9x9x16xf32, #tpu.memory_space<vmem>>) attributes {dimension_semantics = [#tpu.dimension_semantics<parallel>, #tpu.dimension_semantics<parallel>], iteration_bounds = array<i64: 2, 1>, scalar_prefetch = 0 : i64, scratch_operands = 1 : i64, tpu.core_type = #tpu.core_type<tc>, window_params = [{transform_indices = @transform_0, window_bounds = array<i64: 1, 8, 8, 16>}, {transform_indices = @transform_1, window_bounds = array<i64: 1, 1, 8, 16>}, {pipeline_mode = #tpu.pipeline_mode<synchronous>, transform_indices = @transform_2, window_bounds = array<i64: 4, 16, 4>}, {pipeline_mode = #tpu.pipeline_mode<synchronous>, transform_indices = @transform_3, window_bounds = array<i64: 1, 4>}, {transform_indices = @transform_4, window_bounds = array<i64: 1, 8, 8, 4>}]} {
    %c0 = arith.constant 0 : index
    %c0_0 = arith.constant 0 : index
    %c0_1 = arith.constant 0 : index
    %c0_2 = arith.constant 0 : index
    %0 = vector.load %arg2[%c0, %c0_0, %c0_1, %c0_2] : memref<1x8x8x16xf32, #tpu.memory_space<vmem>>, vector<1x8x8x16xf32>
    %1 = vector.shape_cast %0 : vector<1x8x8x16xf32> to vector<8x8x16xf32>
    %c0_3 = arith.constant 0 : index
    %c0_4 = arith.constant 0 : index
    %c0_5 = arith.constant 0 : index
    %2 = vector.load %arg7[%c0_3, %c0_4, %c0_5] : memref<9x9x16xf32, #tpu.memory_space<vmem>>, vector<8x8x16xf32>
    tpu.vector_store %arg7[%c0_3, %c0_4, %c0_5], %1 {strides = array<i32>} : memref<9x9x16xf32, #tpu.memory_space<vmem>>, vector<8x8x16xf32>,
    %c0_6 = arith.constant 0 : index
    %c0_7 = arith.constant 0 : index
    %c0_8 = arith.constant 0 : index
    %c0_9 = arith.constant 0 : index
    %3 = vector.load %arg3[%c0_6, %c0_7, %c0_8, %c0_9] : memref<1x1x8x16xf32, #tpu.memory_space<vmem>>, vector<1x1x8x16xf32>
    %4 = vector.shape_cast %3 : vector<1x1x8x16xf32> to vector<1x8x16xf32>
    %c8 = arith.constant 8 : index
    %c0_10 = arith.constant 0 : index
    %c0_11 = arith.constant 0 : index
    %5 = vector.load %arg7[%c8, %c0_10, %c0_11] : memref<9x9x16xf32, #tpu.memory_space<vmem>>, vector<1x8x16xf32>
    tpu.vector_store %arg7[%c8, %c0_10, %c0_11], %4 {strides = array<i32>} : memref<9x9x16xf32, #tpu.memory_space<vmem>>, vector<1x8x16xf32>,
    %cst = arith.constant 0.000000e+00 : f32
    %6 = vector.broadcast %cst : f32 to vector<9x1x16xf32>
    %c0_12 = arith.constant 0 : index
    %c8_13 = arith.constant 8 : index
    %c0_14 = arith.constant 0 : index
    %7 = vector.load %arg7[%c0_12, %c8_13, %c0_14] : memref<9x9x16xf32, #tpu.memory_space<vmem>>, vector<9x1x16xf32>
    tpu.vector_store %arg7[%c0_12, %c8_13, %c0_14], %6 {strides = array<i32>} : memref<9x9x16xf32, #tpu.memory_space<vmem>>, vector<9x1x16xf32>,
    %c0_15 = arith.constant 0 : index
    %c0_16 = arith.constant 0 : index
    %c0_17 = arith.constant 0 : index
    %8 = vector.load %arg7[%c0_15, %c0_16, %c0_17] : memref<9x9x16xf32, #tpu.memory_space<vmem>>, vector<8x8x16xf32>
    %9 = vector.shape_cast %8 : vector<8x8x16xf32> to vector<64x16xf32>
    %c0_18 = arith.constant 0 : index
    %c0_19 = arith.constant 0 : index
    %c0_20 = arith.constant 0 : index
    %10 = vector.load %arg4[%c0_18, %c0_19, %c0_20] : memref<4x16x4xf32, #tpu.memory_space<vmem>>, vector<1x16x4xf32>
    %11 = vector.shape_cast %10 : vector<1x16x4xf32> to vector<16x4xf32>
    %cst_21 = arith.constant dense<0.000000e+00> : vector<64x4xf32>
    %12 = tpu.matmul %9, %11, %cst_21 {dimension_numbers = #tpu.dot_dimension_numbers<[1], [0], [0], [1], [0, 0, 1, 1], [], []>} : vector<64x16xf32>, vector<16x4xf32>, vector<64x4xf32> -> vector<64x4xf32>
    %c0_22 = arith.constant 0 : index
    %c1 = arith.constant 1 : index
    %c0_23 = arith.constant 0 : index
    %13 = vector.load %arg7[%c0_22, %c1, %c0_23] : memref<9x9x16xf32, #tpu.memory_space<vmem>>, vector<8x8x16xf32>
    %14 = vector.shape_cast %13 : vector<8x8x16xf32> to vector<64x16xf32>
    %c1_24 = arith.constant 1 : index
    %c0_25 = arith.constant 0 : index
    %c0_26 = arith.constant 0 : index
    %15 = vector.load %arg4[%c1_24, %c0_25, %c0_26] : memref<4x16x4xf32, #tpu.memory_space<vmem>>, vector<1x16x4xf32>
    %16 = vector.shape_cast %15 : vector<1x16x4xf32> to vector<16x4xf32>
    %cst_27 = arith.constant dense<0.000000e+00> : vector<64x4xf32>
    %17 = tpu.matmul %14, %16, %cst_27 {dimension_numbers = #tpu.dot_dimension_numbers<[1], [0], [0], [1], [0, 0, 1, 1], [], []>} : vector<64x16xf32>, vector<16x4xf32>, vector<64x4xf32> -> vector<64x4xf32>
    %18 = arith.addf %12, %17 : vector<64x4xf32>
    %c1_28 = arith.constant 1 : index
    %c0_29 = arith.constant 0 : index
    %c0_30 = arith.constant 0 : index
    %19 = vector.load %arg7[%c1_28, %c0_29, %c0_30] : memref<9x9x16xf32, #tpu.memory_space<vmem>>, vector<8x8x16xf32>
    %20 = vector.shape_cast %19 : vector<8x8x16xf32> to vector<64x16xf32>
    %c2 = arith.constant 2 : index
    %c0_31 = arith.constant 0 : index
    %c0_32 = arith.constant 0 : index
    %21 = vector.load %arg4[%c2, %c0_31, %c0_32] : memref<4x16x4xf32, #tpu.memory_space<vmem>>, vector<1x16x4xf32>
    %22 = vector.shape_cast %21 : vector<1x16x4xf32> to vector<16x4xf32>
    %cst_33 = arith.constant dense<0.000000e+00> : vector<64x4xf32>
    %23 = tpu.matmul %20, %22, %cst_33 {dimension_numbers = #tpu.dot_dimension_numbers<[1], [0], [0], [1], [0, 0, 1, 1], [], []>} : vector<64x16xf32>, vector<16x4xf32>, vector<64x4xf32> -> vector<64x4xf32>
    %24 = arith.addf %18, %23 : vector<64x4xf32>
    %c1_34 = arith.constant 1 : index
    %c1_35 = arith.constant 1 : index
    %c0_36 = arith.constant 0 : index
    %25 = vector.load %arg7[%c1_34, %c1_35, %c0_36] : memref<9x9x16xf32, #tpu.memory_space<vmem>>, vector<8x8x16xf32>
    %26 = vector.shape_cast %25 : vector<8x8x16xf32> to vector<64x16xf32>
    %c3 = arith.constant 3 : index
    %c0_37 = arith.constant 0 : index
    %c0_38 = arith.constant 0 : index
    %27 = vector.load %arg4[%c3, %c0_37, %c0_38] : memref<4x16x4xf32, #tpu.memory_space<vmem>>, vector<1x16x4xf32>
    %28 = vector.shape_cast %27 : vector<1x16x4xf32> to vector<16x4xf32>
    %cst_39 = arith.constant dense<0.000000e+00> : vector<64x4xf32>
    %29 = tpu.matmul %26, %28, %cst_39 {dimension_numbers = #tpu.dot_dimension_numbers<[1], [0], [0], [1], [0, 0, 1, 1], [], []>} : vector<64x16xf32>, vector<16x4xf32>, vector<64x4xf32> -> vector<64x4xf32>
    %30 = arith.addf %24, %29 : vector<64x4xf32>
    %c0_40 = arith.constant 0 : index
    %c0_41 = arith.constant 0 : index
    %31 = vector.load %arg5[%c0_40, %c0_41] : memref<1x4xf32, #tpu.memory_space<vmem>>, vector<1x4xf32>
    %32 = vector.broadcast %31 : vector<1x4xf32> to vector<64x4xf32>
    %33 = arith.addf %30, %32 : vector<64x4xf32>
    %34 = vector.shape_cast %33 : vector<64x4xf32> to vector<8x8x4xf32>
    %c0_42 = arith.constant 0 : index
    %c0_43 = arith.constant 0 : index
    %c0_44 = arith.constant 0 : index
    %c0_45 = arith.constant 0 : index
    %35 = vector.load %arg6[%c0_42, %c0_43, %c0_44, %c0_45] : memref<1x8x8x4xf32, #tpu.memory_space<vmem>>, vector<1x8x8x4xf32>
    %36 = vector.shape_cast %35 : vector<1x8x8x4xf32> to vector<8x8x4xf32>
    %37 = vector.shape_cast %34 : vector<8x8x4xf32> to vector<1x8x8x4xf32>
    tpu.vector_store %arg6[%c0_42, %c0_43, %c0_44, %c0_45], %37 {strides = array<i32>} : memref<1x8x8x4xf32, #tpu.memory_space<vmem>>, vector<1x8x8x4xf32>,
    return
  }
  func.func @transform_0(%arg0: i32, %arg1: i32) -> (i32, i32, i32, i32) {
    %c0_i32 = arith.constant 0 : i32
    %c0_i32_0 = arith.constant 0 : i32
    %c0_i32_1 = arith.constant 0 : i32
    return %arg0, %arg1, %c0_i32, %c0_i32_0 : i32, i32, i32, i32
  }
  func.func @transform_1(%arg0: i32, %arg1: i32) -> (i32, i32, i32, i32) {
    %c0_i32 = arith.constant 0 : i32
    %c0_i32_0 = arith.constant 0 : i32
    %c0_i32_1 = arith.constant 0 : i32
    return %arg0, %arg1, %c0_i32, %c0_i32_0 : i32, i32, i32, i32
  }
  func.func @transform_2(%arg0: i32, %arg1: i32) -> (i32, i32, i32) {
    %c0_i32 = arith.constant 0 : i32
    %c0_i32_0 = arith.constant 0 : i32
    %c0_i32_1 = arith.constant 0 : i32
    %c0_i32_2 = arith.constant 0 : i32
    return %c0_i32, %c0_i32_0, %c0_i32_1 : i32, i32, i32
  }
  func.func @transform_3(%arg0: i32, %arg1: i32) -> (i32, i32) {
    %c0_i32 = arith.constant 0 : i32
    %c0_i32_0 = arith.constant 0 : i32
    %c0_i32_1 = arith.constant 0 : i32
    return %c0_i32, %c0_i32_0 : i32, i32
  }
  func.func @transform_4(%arg0: i32, %arg1: i32) -> (i32, i32, i32, i32) {
    %c0_i32 = arith.constant 0 : i32
    %c0_i32_0 = arith.constant 0 : i32
    %c0_i32_1 = arith.constant 0 : i32
    return %arg0, %arg1, %c0_i32, %c0_i32_0 : i32, i32, i32, i32
  }
}

</mosaic_0001>

<llo_original>
// kernel: downsample_forward.1
$region0: #{downsample_forward.1}
  #allocation0 [shape = 'u32[]', space=smem, size = 0x4, offset = 0x4, fixed_abs, tag = 'smem constant byte address 0x4 - core index']
  #allocation1 [shape = 'u32[144,128]{1,0:T(1,128)}', space=vmem, size = 0x12000, scoped, tag = 'internal scratch']
  #allocation2 [shape = 'f32[9,9,16]{2,1,0:T(8,128)}', space=vmem, size = 0x12000, scoped, tag = 'scratch operand']
  %s0 = inlined_call_operand.vmem [shape: f32[2,8,8,16], index: 0, kind: input, shape index: {}]
  %s1 = inlined_call_operand.vmem [shape: f32[2,1,8,16], index: 1, kind: input, shape index: {}]
  %s2 = inlined_call_operand.vmem [shape: f32[4,16,4], index: 2, kind: input, shape index: {}]
  %s3 = inlined_call_operand.vmem [shape: f32[1,4], index: 3, kind: input, shape index: {}]
  %s4 = inlined_call_operand.vmem [shape: f32[2,8,8,4], index: 4, kind: output, shape index: {}]
  %s5 = sld [smem:[#allocation0]]
  $region49: #{downsample_forward.1} parent=0
    _
  %s7 = ssub.s32 1, %s5
  %s8 = scalar_select 0, %s7, %s5
  loop: start=0, step=1, limit=4
  $region2: #{downsample_forward.1} parent=0 // loop_pre_header
    _
  $region3: #{downsample_forward.1} parent=0 // loop_header
    %s10 = sphi 0, %s14
    %p11 = scmp.ge.s32.totalorder %s10, 4
    %s17 = sphi 0, %s29
    %s18 = sphi 0, %s25
    %s19 = sphi 0, %s17
    %s20 = sphi 0, %s18
    %s21 = sphi 0, %s19
    %s22 = sphi 0, %s20
    %s34 = sphi 0, %s36
    %s37 = sphi 0, %s34
    %s38 = sphi 0, %s37
    %s54 = sphi 0, %s38
    %s62 = sphi 0, %s64
    %s65 = sphi 0, %s62
    %s66 = sphi 0, %s65
    %s82 = sphi 0, %s66
    %s86 = sphi 0, %s86
    %s88 = sphi 0, %s86
    %s89 = sphi 0, %s88
    %s103 = sphi 0, %s89
    %s107 = sphi 0, %s107
    %s109 = sphi 0, %s107
    %s110 = sphi 0, %s109
    %s124 = sphi 0, %s110
    %s132 = sphi 0, %s134
    %s135 = sphi 0, %s132
    %s136 = sphi 0, %s135
    %s152 = sphi 0, %s136
  $region4: #{downsample_forward.1} parent=0 // loop_header_branch
    %13 = sbr.rel (%p11) target = $region8
  $region5: #{downsample_forward.1} parent=0 // loop_body
    %s15 = ssub.s32 %s10, 1
    %s16 = ssub.s32 %s10, 2
    %s23 = sadd.s32 1, %s18
    %p24 = scmp.ge.s32.totalorder %s23, 1
    %s25 = scalar_select %p24, 0, %s23
    %s26 = sadd.s32 1, %s17
    %s27 = scalar_select %p24, %s26, %s17
    %p28 = scmp.ge.s32.totalorder %s27, 2
    %s29 = scalar_select %p28, 0, %s27
    %s30 = ssub.s32 %s17, %s29
    %s31 = ssub.s32 %s18, %s25
    %s32 = sor.u32 %s30, %s31
    %p33 = scmp.eq.s32.totalorder %s32, 0
    %s35 = sadd.s32 %s34, 1
    %s36 = scalar_select %p33, %s34, %s35
    %p39 = pneg %p33
    %p40 = scmp.eq.s32.totalorder %s10, 1
    %p41 = por %p39, %p40
    %p42 = scmp.ne.s32.totalorder %s34, %s37
    %p43 = scmp.eq.s32.totalorder %s10, 0
    %p44 = por %p42, %p43
    %p45 = scmp.ne.s32.totalorder %s34, %s37
    %p46 = scmp.eq.s32.totalorder %s15, 1
    %p47 = por %p45, %p46
    %p48 = scmp.ne.s32.totalorder %s37, %s38
    %p49 = scmp.eq.s32.totalorder %s15, 0
    %p50 = por %p48, %p49
    %p51 = scmp.ne.s32.totalorder %s37, %s38
    %p52 = scmp.eq.s32.totalorder %s16, 1
    %p53 = por %p51, %p52
    %p55 = scmp.ne.s32.totalorder %s38, %s54
    %p56 = scmp.eq.s32.totalorder %s16, 0
    %p57 = por %p55, %p56
    %s58 = ssub.s32 %s17, %s29
    %s59 = ssub.s32 %s18, %s25
    %s60 = sor.u32 %s58, %s59
    %p61 = scmp.eq.s32.totalorder %s60, 0
    %s63 = sadd.s32 %s62, 1
    %s64 = scalar_select %p61, %s62, %s63
    %p67 = pneg %p61
    %p68 = scmp.eq.s32.totalorder %s10, 1
    %p69 = por %p67, %p68
    %p70 = scmp.ne.s32.totalorder %s62, %s65
    %p71 = scmp.eq.s32.totalorder %s10, 0
    %p72 = por %p70, %p71
    %p73 = scmp.ne.s32.totalorder %s62, %s65
    %p74 = scmp.eq.s32.totalorder %s15, 1
    %p75 = por %p73, %p74
    %p76 = scmp.ne.s32.totalorder %s65, %s66
    %p77 = scmp.eq.s32.totalorder %s15, 0
    %p78 = por %p76, %p77
    %p79 = scmp.ne.s32.totalorder %s65, %s66
    %p80 = scmp.eq.s32.totalorder %s16, 1
    %p81 = por %p79, %p80
    %p83 = scmp.ne.s32.totalorder %s66, %s82
    %p84 = scmp.eq.s32.totalorder %s16, 0
    %p85 = por %p83, %p84
    %s87 = sadd.s32 %s86, 1
    %p90 = scmp.eq.s32.totalorder %s10, 1
    %p91 = scmp.ne.s32.totalorder %s86, %s88
    %p92 = scmp.eq.s32.totalorder %s10, 0
    %p93 = por %p91, %p92
    %p94 = scmp.ne.s32.totalorder %s86, %s88
    %p95 = scmp.eq.s32.totalorder %s15, 1
    %p96 = por %p94, %p95
    %p97 = scmp.ne.s32.totalorder %s88, %s89
    %p98 = scmp.eq.s32.totalorder %s15, 0
    %p99 = por %p97, %p98
    %p100 = scmp.ne.s32.totalorder %s88, %s89
    %p101 = scmp.eq.s32.totalorder %s16, 1
    %p102 = por %p100, %p101
    %p104 = scmp.ne.s32.totalorder %s89, %s103
    %p105 = scmp.eq.s32.totalorder %s16, 0
    %p106 = por %p104, %p105
    %s108 = sadd.s32 %s107, 1
    %p111 = scmp.eq.s32.totalorder %s10, 1
    %p112 = scmp.ne.s32.totalorder %s107, %s109
    %p113 = scmp.eq.s32.totalorder %s10, 0
    %p114 = por %p112, %p113
    %p115 = scmp.ne.s32.totalorder %s107, %s109
    %p116 = scmp.eq.s32.totalorder %s15, 1
    %p117 = por %p115, %p116
    %p118 = scmp.ne.s32.totalorder %s109, %s110
    %p119 = scmp.eq.s32.totalorder %s15, 0
    %p120 = por %p118, %p119
    %p121 = scmp.ne.s32.totalorder %s109, %s110
    %p122 = scmp.eq.s32.totalorder %s16, 1
    %p123 = por %p121, %p122
    %p125 = scmp.ne.s32.totalorder %s110, %s124
    %p126 = scmp.eq.s32.totalorder %s16, 0
    %p127 = por %p125, %p126
    %s128 = ssub.s32 %s17, %s29
    %s129 = ssub.s32 %s18, %s25
    %s130 = sor.u32 %s128, %s129
    %p131 = scmp.eq.s32.totalorder %s130, 0
    %s133 = sadd.s32 %s132, 1
    %s134 = scalar_select %p131, %s132, %s133
    %p137 = pneg %p131
    %p138 = scmp.eq.s32.totalorder %s10, 1
    %p139 = por %p137, %p138
    %p140 = scmp.ne.s32.totalorder %s132, %s135
    %p141 = scmp.eq.s32.totalorder %s10, 0
    %p142 = por %p140, %p141
    %p143 = scmp.ne.s32.totalorder %s132, %s135
    %p144 = scmp.eq.s32.totalorder %s15, 1
    %p145 = por %p143, %p144
    %p146 = scmp.ne.s32.totalorder %s135, %s136
    %p147 = scmp.eq.s32.totalorder %s15, 0
    %p148 = por %p146, %p147
    %p149 = scmp.ne.s32.totalorder %s135, %s136
    %p150 = scmp.eq.s32.totalorder %s16, 1
    %p151 = por %p149, %p150
    %p153 = scmp.ne.s32.totalorder %s136, %s152
    %p154 = scmp.eq.s32.totalorder %s16, 0
    %p155 = por %p153, %p154
    %p156 = scmp.le.s32.totalorder 1, %s10
    %p157 = scmp.lt.s32.totalorder %s10, 3
    %p158 = pnand %p156, %p157
    %p159 = pneg %p158
    // Predicated region
    $region9: #{downsample_forward.1} parent=5 // pred_check
      _
    $region10: #{downsample_forward.1} parent=5 // pred_check_branch
      %161 = sbr.rel (%p158) target = $region12
    $region11: #{downsample_forward.1} parent=5 // pred_region
      %s162 = ssub.s32 %s10, 1
      // Predicated region
      $region13: #{downsample_forward.1} parent=11 // pred_check
        %p163 = pneg %p99
      $region14: #{downsample_forward.1} parent=11 // pred_check_branch
        %165 = sbr.rel (%p163) target = $region16
      $region15: #{downsample_forward.1} parent=11 // pred_region
        _
      $region16: #{downsample_forward.1} parent=11 // pred_fallthru
        _
      // Predicated region
      $region17: #{downsample_forward.1} parent=11 // pred_check
        %p166 = pneg %p120
      $region18: #{downsample_forward.1} parent=11 // pred_check_branch
        %168 = sbr.rel (%p166) target = $region20
      $region19: #{downsample_forward.1} parent=11 // pred_region
        _
      $region20: #{downsample_forward.1} parent=11 // pred_fallthru
        _
    $region12: #{downsample_forward.1} parent=5 // pred_fallthru
      _
    %p169 = scmp.lt.s32.totalorder %s10, 2
    // Predicated region
    $region21: #{downsample_forward.1} parent=5 // pred_check
      %p170 = pneg %p169
    $region22: #{downsample_forward.1} parent=5 // pred_check_branch
      %172 = sbr.rel (%p170) target = $region24
    $region23: #{downsample_forward.1} parent=5 // pred_region
      // Predicated region
      $region25: #{downsample_forward.1} parent=23 // pred_check
        %p173 = pneg %p44
      $region26: #{downsample_forward.1} parent=23 // pred_check_branch
        %175 = sbr.rel (%p173) target = $region28
      $region27: #{downsample_forward.1} parent=23 // pred_region
        %s176 = smul.u32 8, %s18
        %p177 = scmp.lt.s32.totalorder %s17, 1
        %s178 = scalar_select %p177, %s17, 1
        %p179 = scmp.lt.s32.totalorder %s176, 7
        %s180 = scalar_select %p179, %s176, 7
        %s181 = smul.addr %s178, 8
        %s182 = sadd.s32 %s180, %s181
        %s183 = smul.addr %s182, 8
        %s184 = scalar_lea.vmem %s0, %s183
        %s185 = smul.u32 8, %s18
      $region28: #{downsample_forward.1} parent=23 // pred_fallthru
        _
      // Predicated region
      $region29: #{downsample_forward.1} parent=23 // pred_check
        %p186 = pneg %p72
      $region30: #{downsample_forward.1} parent=23 // pred_check_branch
        %188 = sbr.rel (%p186) target = $region32
      $region31: #{downsample_forward.1} parent=23 // pred_region
        %p189 = scmp.lt.s32.totalorder %s17, 1
        %s190 = scalar_select %p189, %s17, 1
        %p191 = scmp.lt.s32.totalorder %s18, 0
        %s192 = scalar_select %p191, %s18, 0
        %s193 = sadd.s32 %s192, %s190
        %s194 = smul.addr %s193, 8
        %s195 = scalar_lea.vmem %s1, %s194
      $region32: #{downsample_forward.1} parent=23 // pred_fallthru
        _
    $region24: #{downsample_forward.1} parent=5 // pred_fallthru
      _
    %p196 = scmp.le.s32.totalorder 1, %s10
    %p197 = scmp.lt.s32.totalorder %s10, 3
    %p198 = pnand %p196, %p197
    %p199 = pneg %p198
    // Predicated region
    $region33: #{downsample_forward.1} parent=5 // pred_check
      _
    $region34: #{downsample_forward.1} parent=5 // pred_check_branch
      %201 = sbr.rel (%p198) target = $region36
    $region35: #{downsample_forward.1} parent=5 // pred_region
      %s202 = ssub.s32 %s10, 1
      %s203 = smul.u32 8, %s20
      %p204 = scmp.lt.s32.totalorder %s19, 1
      %s205 = scalar_select %p204, %s19, 1
      %p206 = scmp.lt.s32.totalorder %s203, 7
      %s207 = scalar_select %p206, %s203, 7
      %s208 = smul.addr %s205, 8
      %s209 = sadd.s32 %s207, %s208
      %s210 = smul.addr %s209, 8
      %s211 = scalar_lea.vmem %s0, %s210
      %p212 = pneg %p50
      %p213 = pneg %p47
      %p214 = scmp.lt.s32.totalorder %s19, 1
      %s215 = scalar_select %p214, %s19, 1
      %p216 = scmp.lt.s32.totalorder %s20, 0
      %s217 = scalar_select %p216, %s20, 0
      %s218 = sadd.s32 %s217, %s215
      %s219 = smul.addr %s218, 8
      %s220 = scalar_lea.vmem %s1, %s219
      %p221 = pneg %p78
      %p222 = pneg %p75
      %p223 = pneg %p99
      %p224 = pneg %p96
      %p225 = pneg %p120
      %p226 = pneg %p117
      %p227 = pneg %p148
      %p228 = pneg %p145
      %s229 = smul.u32 8, %s20
      %p230 = scmp.lt.s32.totalorder %s19, 1
      %s231 = scalar_select %p230, %s19, 1
      %p232 = scmp.lt.s32.totalorder %s229, 7
      %s233 = scalar_select %p232, %s229, 7
      %s234 = smul.addr %s231, 8
      %s235 = sadd.s32 %s233, %s234
      %s236 = smul.addr %s235, 8
      %s237 = scalar_lea.vmem %s4, %s236
      %s238 = smul.u32 8, %s20
      %p239 = scmp.lt.s32.totalorder %s19, 1
      %s240 = scalar_select %p239, %s19, 1
      %p241 = scmp.lt.s32.totalorder %s238, 7
      %s242 = scalar_select %p241, %s238, 7
      %s243 = smul.addr %s240, 8
      %s244 = sadd.s32 %s242, %s243
      %s245 = smul.addr %s244, 8
      %s246 = scalar_lea.vmem %s0, %s245
      %s247 = smul.u32 8, %s20
      %p248 = scmp.lt.s32.totalorder %s19, 1
      %s249 = scalar_select %p248, %s19, 1
      %p250 = scmp.lt.s32.totalorder %s20, 0
      %s251 = scalar_select %p250, %s20, 0
      %s252 = sadd.s32 %s251, %s249
      %s253 = smul.addr %s252, 8
      %s254 = scalar_lea.vmem %s1, %s253
      %s255 = smul.u32 8, %s20
      %p256 = scmp.lt.s32.totalorder %s19, 1
      %s257 = scalar_select %p256, %s19, 1
      %p258 = scmp.lt.s32.totalorder %s255, 7
      %s259 = scalar_select %p258, %s255, 7
      %s260 = smul.addr %s257, 8
      %s261 = sadd.s32 %s259, %s260
      %s262 = smul.addr %s261, 8
      %s263 = scalar_lea.vmem %s4, %s262
      %s264 = smul.u32 8, %s20
      %v265 = vld [vmem:[%s246] sm:$0xff]
      %v266 = vld [vmem:[%s246 + $0x8] sm:$0xff]
      %v267 = vld [vmem:[%s246 + $0x10] sm:$0xff]
      %v268 = vld [vmem:[%s246 + $0x18] sm:$0xff]
      %v269 = vld [vmem:[%s246 + $0x20] sm:$0xff]
      %v270 = vld [vmem:[%s246 + $0x28] sm:$0xff]
      %v271 = vld [vmem:[%s246 + $0x30] sm:$0xff]
      %v272 = vld [vmem:[%s246 + $0x38] sm:$0xff]
      %vm273 = vcmask 130048
      %274 = vst.msk [vmem:[#allocation2] sm:$0xff] %vm273, %v265
      %275 = vst.msk [vmem:[#allocation2 + $0x10] sm:$0xff] %vm273, %v266
      %276 = vst.msk [vmem:[#allocation2 + $0x20] sm:$0xff] %vm273, %v267
      %277 = vst.msk [vmem:[#allocation2 + $0x30] sm:$0xff] %vm273, %v268
      %278 = vst.msk [vmem:[#allocation2 + $0x40] sm:$0xff] %vm273, %v269
      %279 = vst.msk [vmem:[#allocation2 + $0x50] sm:$0xff] %vm273, %v270
      %280 = vst.msk [vmem:[#allocation2 + $0x60] sm:$0xff] %vm273, %v271
      %281 = vst.msk [vmem:[#allocation2 + $0x70] sm:$0xff] %vm273, %v272
      %v282 = vld [vmem:[%s254] sm:$0xff]
      %s283 = scalar_lea.vmem [#allocation2], 128
      %284 = vst.msk [vmem:[%s283] sm:$0xff] %vm273, %v282
      %vm285 = vcmask 122880
      %286 = vst.msk [vmem:[#allocation2 + $0x8] sm:$0x1] %vm285, 0.0
      %287 = vst.msk [vmem:[#allocation2 + $0x18] sm:$0x1] %vm285, 0.0
      %288 = vst.msk [vmem:[#allocation2 + $0x28] sm:$0x1] %vm285, 0.0
      %289 = vst.msk [vmem:[#allocation2 + $0x38] sm:$0x1] %vm285, 0.0
      %290 = vst.msk [vmem:[#allocation2 + $0x48] sm:$0x1] %vm285, 0.0
      %291 = vst.msk [vmem:[#allocation2 + $0x58] sm:$0x1] %vm285, 0.0
      %292 = vst.msk [vmem:[#allocation2 + $0x68] sm:$0x1] %vm285, 0.0
      %293 = vst.msk [vmem:[#allocation2 + $0x78] sm:$0x1] %vm285, 0.0
      %294 = vst.msk [vmem:[#allocation2 + $0x88] sm:$0x1] %vm285, 0.0
      %v295 = vld [vmem:[#allocation2] sm:$0xff]
      %v296 = vld [vmem:[#allocation2 + $0x10] sm:$0xff]
      %v297 = vld [vmem:[#allocation2 + $0x20] sm:$0xff]
      %v298 = vld [vmem:[#allocation2 + $0x30] sm:$0xff]
      %v299 = vld [vmem:[#allocation2 + $0x40] sm:$0xff]
      %v300 = vld [vmem:[#allocation2 + $0x50] sm:$0xff]
      %v301 = vld [vmem:[#allocation2 + $0x60] sm:$0xff]
      %v302 = vld [vmem:[#allocation2 + $0x70] sm:$0xff]
      %v303 = vld [vmem:[%s2] sm:$0xff]
      %v304 = vld [vmem:[%s2 + $0x8] sm:$0xff]
      %v305 = vld [vmem:[#allocation2 + $0x1] sm:$0xff]
      %v306 = vld [vmem:[#allocation2 + $0x11] sm:$0xff]
      %v307 = vld [vmem:[#allocation2 + $0x21] sm:$0xff]
      %v308 = vld [vmem:[#allocation2 + $0x31] sm:$0xff]
      %v309 = vld [vmem:[#allocation2 + $0x41] sm:$0xff]
      %v310 = vld [vmem:[#allocation2 + $0x51] sm:$0xff]
      %v311 = vld [vmem:[#allocation2 + $0x61] sm:$0xff]
      %v312 = vld [vmem:[#allocation2 + $0x71] sm:$0xff]
      %s313 = scalar_lea.vmem %s2, 16
      %v314 = vld [vmem:[%s313] sm:$0xff]
      %v315 = vld [vmem:[%s313 + $0x8] sm:$0xff]
      %v317 = vsel %vm273, %v305, 0
      %v320 = vsel %vm273, %v306, 0
      %v323 = vsel %vm273, %v307, 0
      %v326 = vsel %vm273, %v308, 0
      %v329 = vsel %vm273, %v309, 0
      %v332 = vsel %vm273, %v310, 0
      %v335 = vsel %vm273, %v311, 0
      %v338 = vsel %vm273, %v312, 0
      %340 = vmatprep.subr.mxu0 0.0
      %341 = vmatpush1.msra.mxu0 %v314
      %342 = vmatprep.subr.mxu0 0.0
      %343 = vmatpush1.msra.mxu0 %v315
      %344 = vmatprep.subr.mxu0 0.0
      %345 = vmatpush1.msra.mxu0 0.0
      %346 = vmatprep.subr.mxu0 0.0
      %347 = vmatpush1.msra.mxu0 0.0
      %348 = vmatprep.subr.mxu0 0.0
      %349 = vmatpush1.msra.mxu0 0.0
      %350 = vmatprep.subr.mxu0 0.0
      %351 = vmatpush1.msra.mxu0 0.0
      %352 = vmatprep.subr.mxu0 0.0
      %353 = vmatpush1.msra.mxu0 0.0
      %354 = vmatprep.subr.mxu0 0.0
      %355 = vmatpush1.msra.mxu0 0.0
      %356 = vmatprep.subr.mxu0 0.0
      %357 = vmatpush1.msra.mxu0 0.0
      %358 = vmatprep.subr.mxu0 0.0
      %359 = vmatpush1.msra.mxu0 0.0
      %360 = vmatprep.subr.mxu0 0.0
      %361 = vmatpush1.msra.mxu0 0.0
      %362 = vmatprep.subr.mxu0 0.0
      %363 = vmatpush1.msra.mxu0 0.0
      %364 = vmatprep.subr.mxu0 0.0
      %365 = vmatpush1.msra.mxu0 0.0
      %366 = vmatprep.subr.mxu0 0.0
      %367 = vmatpush1.msra.mxu0 0.0
      %368 = vmatprep.subr.mxu0 0.0
      %369 = vmatpush1.msra.mxu0 0.0
      %370 = vmatprep.subr.mxu0 0.0
      %371 = vmatpush1.msra.mxu0 0.0
      %372 = vmatprep.subr.mxu0 0.0
      %373 = vmatpush1.msra.mxu0 0.0
      %374 = vmatprep.subr.mxu0 0.0
      %375 = vmatpush1.msra.mxu0 0.0
      %376 = vmatprep.subr.mxu0 0.0
      %377 = vmatpush1.msra.mxu0 0.0
      %378 = vmatprep.subr.mxu0 0.0
      %379 = vmatpush1.msra.mxu0 0.0
      %380 = vmatprep.subr.mxu0 0.0
      %381 = vmatpush1.msra.mxu0 0.0
      %382 = vmatprep.subr.mxu0 0.0
      %383 = vmatpush1.msra.mxu0 0.0
      %384 = vmatprep.subr.mxu0 0.0
      %385 = vmatpush1.msra.mxu0 0.0
      %386 = vmatprep.subr.mxu0 0.0
      %387 = vmatpush1.msra.mxu0 0.0
      %388 = vmatprep.subr.mxu0 0.0
      %389 = vmatpush1.msra.mxu0 0.0
      %390 = vmatprep.subr.mxu0 0.0
      %391 = vmatpush1.msra.mxu0 0.0
      %392 = vmatprep.subr.mxu0 0.0
      %393 = vmatpush1.msra.mxu0 0.0
      %394 = vmatprep.subr.mxu0 0.0
      %395 = vmatpush1.msra.mxu0 0.0
      %396 = vmatprep.subr.mxu0 0.0
      %397 = vmatpush1.msra.mxu0 0.0
      %398 = vmatprep.subr.mxu0 0.0
      %399 = vmatpush1.msra.mxu0 0.0
      %400 = vmatprep.subr.mxu0 0.0
      %401 = vmatpush1.msra.mxu0 0.0
      %402 = vmatprep.subr.mxu0 0.0
      %403 = vmatpush1.msra.mxu0 0.0
      %404 = vmatprep.mubr.f32.mxu0 0.0
      %405 = vmatmul.mubr.f32.gmra.mrb[0].mxu0 %v317
      %v406 = vpop.f32.mrb[0].mxu0
      %v407 = vadd.f32 0.0, %v406
      %v408 = vpop.f32.mrb[0].mxu0
      %409 = vmatprep.mubr.f32.mxu0 0.0
      %410 = vmatmul.mubr.f32.gmra.mrb[0].mxu0 %v320
      %v411 = vpop.f32.mrb[0].mxu0
      %v412 = vadd.f32 0.0, %v411
      %v413 = vpop.f32.mrb[0].mxu0
      %414 = vmatprep.mubr.f32.mxu0 0.0
      %415 = vmatmul.mubr.f32.gmra.mrb[0].mxu0 %v323
      %v416 = vpop.f32.mrb[0].mxu0
      %v417 = vadd.f32 0.0, %v416
      %v418 = vpop.f32.mrb[0].mxu0
      %419 = vmatprep.mubr.f32.mxu0 0.0
      %420 = vmatmul.mubr.f32.gmra.mrb[0].mxu0 %v326
      %v421 = vpop.f32.mrb[0].mxu0
      %v422 = vadd.f32 0.0, %v421
      %v423 = vpop.f32.mrb[0].mxu0
      %424 = vmatprep.mubr.f32.mxu0 0.0
      %425 = vmatmul.mubr.f32.gmra.mrb[0].mxu0 %v329
      %v426 = vpop.f32.mrb[0].mxu0
      %v427 = vadd.f32 0.0, %v426
      %v428 = vpop.f32.mrb[0].mxu0
      %429 = vmatprep.mubr.f32.mxu0 0.0
      %430 = vmatmul.mubr.f32.gmra.mrb[0].mxu0 %v332
      %v431 = vpop.f32.mrb[0].mxu0
      %v432 = vadd.f32 0.0, %v431
      %v433 = vpop.f32.mrb[0].mxu0
      %434 = vmatprep.mubr.f32.mxu0 0.0
      %435 = vmatmul.mubr.f32.gmra.mrb[0].mxu0 %v335
      %v436 = vpop.f32.mrb[0].mxu0
      %v437 = vadd.f32 0.0, %v436
      %v438 = vpop.f32.mrb[0].mxu0
      %439 = vmatprep.mubr.f32.mxu0 0.0
      %440 = vmatmul.mubr.f32.gmra.mrb[0].mxu0 %v338
      %v441 = vpop.f32.mrb[0].mxu0
      %v442 = vadd.f32 0.0, %v441
      %v443 = vpop.f32.mrb[0].mxu0
      %444 = vdwg.mxu0
      %v446 = vsel %vm273, %v295, 0
      %v449 = vsel %vm273, %v296, 0
      %v452 = vsel %vm273, %v297, 0
      %v455 = vsel %vm273, %v298, 0
      %v458 = vsel %vm273, %v299, 0
      %v461 = vsel %vm273, %v300, 0
      %v464 = vsel %vm273, %v301, 0
      %v467 = vsel %vm273, %v302, 0
      %469 = vmatprep.subr.mxu0 0.0
      %470 = vmatpush1.msra.mxu0 %v303
      %471 = vmatprep.subr.mxu0 0.0
      %472 = vmatpush1.msra.mxu0 %v304
      %473 = vmatprep.subr.mxu0 0.0
      %474 = vmatpush1.msra.mxu0 0.0
      %475 = vmatprep.subr.mxu0 0.0
      %476 = vmatpush1.msra.mxu0 0.0
      %477 = vmatprep.subr.mxu0 0.0
      %478 = vmatpush1.msra.mxu0 0.0
      %479 = vmatprep.subr.mxu0 0.0
      %480 = vmatpush1.msra.mxu0 0.0
      %481 = vmatprep.subr.mxu0 0.0
      %482 = vmatpush1.msra.mxu0 0.0
      %483 = vmatprep.subr.mxu0 0.0
      %484 = vmatpush1.msra.mxu0 0.0
      %485 = vmatprep.subr.mxu0 0.0
      %486 = vmatpush1.msra.mxu0 0.0
      %487 = vmatprep.subr.mxu0 0.0
      %488 = vmatpush1.msra.mxu0 0.0
      %489 = vmatprep.subr.mxu0 0.0
      %490 = vmatpush1.msra.mxu0 0.0
      %491 = vmatprep.subr.mxu0 0.0
      %492 = vmatpush1.msra.mxu0 0.0
      %493 = vmatprep.subr.mxu0 0.0
      %494 = vmatpush1.msra.mxu0 0.0
      %495 = vmatprep.subr.mxu0 0.0
      %496 = vmatpush1.msra.mxu0 0.0
      %497 = vmatprep.subr.mxu0 0.0
      %498 = vmatpush1.msra.mxu0 0.0
      %499 = vmatprep.subr.mxu0 0.0
      %500 = vmatpush1.msra.mxu0 0.0
      %501 = vmatprep.subr.mxu0 0.0
      %502 = vmatpush1.msra.mxu0 0.0
      %503 = vmatprep.subr.mxu0 0.0
      %504 = vmatpush1.msra.mxu0 0.0
      %505 = vmatprep.subr.mxu0 0.0
      %506 = vmatpush1.msra.mxu0 0.0
      %507 = vmatprep.subr.mxu0 0.0
      %508 = vmatpush1.msra.mxu0 0.0
      %509 = vmatprep.subr.mxu0 0.0
      %510 = vmatpush1.msra.mxu0 0.0
      %511 = vmatprep.subr.mxu0 0.0
      %512 = vmatpush1.msra.mxu0 0.0
      %513 = vmatprep.subr.mxu0 0.0
      %514 = vmatpush1.msra.mxu0 0.0
      %515 = vmatprep.subr.mxu0 0.0
      %516 = vmatpush1.msra.mxu0 0.0
      %517 = vmatprep.subr.mxu0 0.0
      %518 = vmatpush1.msra.mxu0 0.0
      %519 = vmatprep.subr.mxu0 0.0
      %520 = vmatpush1.msra.mxu0 0.0
      %521 = vmatprep.subr.mxu0 0.0
      %522 = vmatpush1.msra.mxu0 0.0
      %523 = vmatprep.subr.mxu0 0.0
      %524 = vmatpush1.msra.mxu0 0.0
      %525 = vmatprep.subr.mxu0 0.0
      %526 = vmatpush1.msra.mxu0 0.0
      %527 = vmatprep.subr.mxu0 0.0
      %528 = vmatpush1.msra.mxu0 0.0
      %529 = vmatprep.subr.mxu0 0.0
      %530 = vmatpush1.msra.mxu0 0.0
      %531 = vmatprep.subr.mxu0 0.0
      %532 = vmatpush1.msra.mxu0 0.0
      %533 = vmatprep.mubr.f32.mxu0 0.0
      %534 = vmatmul.mubr.f32.gmra.mrb[0].mxu0 %v446
      %v535 = vpop.f32.mrb[0].mxu0
      %v536 = vadd.f32 %v407, %v535
      %v537 = vpop.f32.mrb[0].mxu0
      %538 = vmatprep.mubr.f32.mxu0 0.0
      %539 = vmatmul.mubr.f32.gmra.mrb[0].mxu0 %v449
      %v540 = vpop.f32.mrb[0].mxu0
      %v541 = vadd.f32 %v412, %v540
      %v542 = vpop.f32.mrb[0].mxu0
      %543 = vmatprep.mubr.f32.mxu0 0.0
      %544 = vmatmul.mubr.f32.gmra.mrb[0].mxu0 %v452
      %v545 = vpop.f32.mrb[0].mxu0
      %v546 = vadd.f32 %v417, %v545
      %v547 = vpop.f32.mrb[0].mxu0
      %548 = vmatprep.mubr.f32.mxu0 0.0
      %549 = vmatmul.mubr.f32.gmra.mrb[0].mxu0 %v455
      %v550 = vpop.f32.mrb[0].mxu0
      %v551 = vadd.f32 %v422, %v550
      %v552 = vpop.f32.mrb[0].mxu0
      %553 = vmatprep.mubr.f32.mxu0 0.0
      %554 = vmatmul.mubr.f32.gmra.mrb[0].mxu0 %v458
      %v555 = vpop.f32.mrb[0].mxu0
      %v556 = vadd.f32 %v427, %v555
      %v557 = vpop.f32.mrb[0].mxu0
      %558 = vmatprep.mubr.f32.mxu0 0.0
      %559 = vmatmul.mubr.f32.gmra.mrb[0].mxu0 %v461
      %v560 = vpop.f32.mrb[0].mxu0
      %v561 = vadd.f32 %v432, %v560
      %v562 = vpop.f32.mrb[0].mxu0
      %563 = vmatprep.mubr.f32.mxu0 0.0
      %564 = vmatmul.mubr.f32.gmra.mrb[0].mxu0 %v464
      %v565 = vpop.f32.mrb[0].mxu0
      %v566 = vadd.f32 %v437, %v565
      %v567 = vpop.f32.mrb[0].mxu0
      %568 = vmatprep.mubr.f32.mxu0 0.0
      %569 = vmatmul.mubr.f32.gmra.mrb[0].mxu0 %v467
      %v570 = vpop.f32.mrb[0].mxu0
      %v571 = vadd.f32 %v442, %v570
      %v572 = vpop.f32.mrb[0].mxu0
      %573 = vdwg.mxu0
      %s574 = scalar_lea.vmem [#allocation2], 16
      %v575 = vld [vmem:[%s574] sm:$0xff]
      %v576 = vld [vmem:[%s574 + $0x10] sm:$0xff]
      %v577 = vld [vmem:[%s574 + $0x20] sm:$0xff]
      %v578 = vld [vmem:[%s574 + $0x30] sm:$0xff]
      %v579 = vld [vmem:[%s574 + $0x40] sm:$0xff]
      %v580 = vld [vmem:[%s574 + $0x50] sm:$0xff]
      %v581 = vld [vmem:[%s574 + $0x60] sm:$0xff]
      %v582 = vld [vmem:[%s574 + $0x70] sm:$0xff]
      %s583 = scalar_lea.vmem %s2, 32
      %v584 = vld [vmem:[%s583] sm:$0xff]
      %v585 = vld [vmem:[%s583 + $0x8] sm:$0xff]
      %v587 = vsel %vm273, %v575, 0
      %v590 = vsel %vm273, %v576, 0
      %v593 = vsel %vm273, %v577, 0
      %v596 = vsel %vm273, %v578, 0
      %v599 = vsel %vm273, %v579, 0
      %v602 = vsel %vm273, %v580, 0
      %v605 = vsel %vm273, %v581, 0
      %v608 = vsel %vm273, %v582, 0
      %610 = vmatprep.subr.mxu0 0.0
      %611 = vmatpush1.msra.mxu0 %v584
      %612 = vmatprep.subr.mxu0 0.0
      %613 = vmatpush1.msra.mxu0 %v585
      %614 = vmatprep.subr.mxu0 0.0
      %615 = vmatpush1.msra.mxu0 0.0
      %616 = vmatprep.subr.mxu0 0.0
      %617 = vmatpush1.msra.mxu0 0.0
      %618 = vmatprep.subr.mxu0 0.0
      %619 = vmatpush1.msra.mxu0 0.0
      %620 = vmatprep.subr.mxu0 0.0
      %621 = vmatpush1.msra.mxu0 0.0
      %622 = vmatprep.subr.mxu0 0.0
      %623 = vmatpush1.msra.mxu0 0.0
      %624 = vmatprep.subr.mxu0 0.0
      %625 = vmatpush1.msra.mxu0 0.0
      %626 = vmatprep.subr.mxu0 0.0
      %627 = vmatpush1.msra.mxu0 0.0
      %628 = vmatprep.subr.mxu0 0.0
      %629 = vmatpush1.msra.mxu0 0.0
      %630 = vmatprep.subr.mxu0 0.0
      %631 = vmatpush1.msra.mxu0 0.0
      %632 = vmatprep.subr.mxu0 0.0
      %633 = vmatpush1.msra.mxu0 0.0
      %634 = vmatprep.subr.mxu0 0.0
      %635 = vmatpush1.msra.mxu0 0.0
      %636 = vmatprep.subr.mxu0 0.0
      %637 = vmatpush1.msra.mxu0 0.0
      %638 = vmatprep.subr.mxu0 0.0
      %639 = vmatpush1.msra.mxu0 0.0
      %640 = vmatprep.subr.mxu0 0.0
      %641 = vmatpush1.msra.mxu0 0.0
      %642 = vmatprep.subr.mxu0 0.0
      %643 = vmatpush1.msra.mxu0 0.0
      %644 = vmatprep.subr.mxu0 0.0
      %645 = vmatpush1.msra.mxu0 0.0
      %646 = vmatprep.subr.mxu0 0.0
      %647 = vmatpush1.msra.mxu0 0.0
      %648 = vmatprep.subr.mxu0 0.0
      %649 = vmatpush1.msra.mxu0 0.0
      %650 = vmatprep.subr.mxu0 0.0
      %651 = vmatpush1.msra.mxu0 0.0
      %652 = vmatprep.subr.mxu0 0.0
      %653 = vmatpush1.msra.mxu0 0.0
      %654 = vmatprep.subr.mxu0 0.0
      %655 = vmatpush1.msra.mxu0 0.0
      %656 = vmatprep.subr.mxu0 0.0
      %657 = vmatpush1.msra.mxu0 0.0
      %658 = vmatprep.subr.mxu0 0.0
      %659 = vmatpush1.msra.mxu0 0.0
      %660 = vmatprep.subr.mxu0 0.0
      %661 = vmatpush1.msra.mxu0 0.0
      %662 = vmatprep.subr.mxu0 0.0
      %663 = vmatpush1.msra.mxu0 0.0
      %664 = vmatprep.subr.mxu0 0.0
      %665 = vmatpush1.msra.mxu0 0.0
      %666 = vmatprep.subr.mxu0 0.0
      %667 = vmatpush1.msra.mxu0 0.0
      %668 = vmatprep.subr.mxu0 0.0
      %669 = vmatpush1.msra.mxu0 0.0
      %670 = vmatprep.subr.mxu0 0.0
      %671 = vmatpush1.msra.mxu0 0.0
      %672 = vmatprep.subr.mxu0 0.0
      %673 = vmatpush1.msra.mxu0 0.0
      %674 = vmatprep.mubr.f32.mxu0 0.0
      %675 = vmatmul.mubr.f32.gmra.mrb[0].mxu0 %v587
      %v676 = vpop.f32.mrb[0].mxu0
      %v677 = vadd.f32 0.0, %v676
      %v678 = vpop.f32.mrb[0].mxu0
      %679 = vmatprep.mubr.f32.mxu0 0.0
      %680 = vmatmul.mubr.f32.gmra.mrb[0].mxu0 %v590
      %v681 = vpop.f32.mrb[0].mxu0
      %v682 = vadd.f32 0.0, %v681
      %v683 = vpop.f32.mrb[0].mxu0
      %684 = vmatprep.mubr.f32.mxu0 0.0
      %685 = vmatmul.mubr.f32.gmra.mrb[0].mxu0 %v593
      %v686 = vpop.f32.mrb[0].mxu0
      %v687 = vadd.f32 0.0, %v686
      %v688 = vpop.f32.mrb[0].mxu0
      %689 = vmatprep.mubr.f32.mxu0 0.0
      %690 = vmatmul.mubr.f32.gmra.mrb[0].mxu0 %v596
      %v691 = vpop.f32.mrb[0].mxu0
      %v692 = vadd.f32 0.0, %v691
      %v693 = vpop.f32.mrb[0].mxu0
      %694 = vmatprep.mubr.f32.mxu0 0.0
      %695 = vmatmul.mubr.f32.gmra.mrb[0].mxu0 %v599
      %v696 = vpop.f32.mrb[0].mxu0
      %v697 = vadd.f32 0.0, %v696
      %v698 = vpop.f32.mrb[0].mxu0
      %699 = vmatprep.mubr.f32.mxu0 0.0
      %700 = vmatmul.mubr.f32.gmra.mrb[0].mxu0 %v602
      %v701 = vpop.f32.mrb[0].mxu0
      %v702 = vadd.f32 0.0, %v701
      %v703 = vpop.f32.mrb[0].mxu0
      %704 = vmatprep.mubr.f32.mxu0 0.0
      %705 = vmatmul.mubr.f32.gmra.mrb[0].mxu0 %v605
      %v706 = vpop.f32.mrb[0].mxu0
      %v707 = vadd.f32 0.0, %v706
      %v708 = vpop.f32.mrb[0].mxu0
      %709 = vmatprep.mubr.f32.mxu0 0.0
      %710 = vmatmul.mubr.f32.gmra.mrb[0].mxu0 %v608
      %v711 = vpop.f32.mrb[0].mxu0
      %v712 = vadd.f32 0.0, %v711
      %v713 = vpop.f32.mrb[0].mxu0
      %714 = vdwg.mxu0
      %v715 = vadd.f32 %v536, %v677
      %v716 = vadd.f32 %v541, %v682
      %v717 = vadd.f32 %v546, %v687
      %v718 = vadd.f32 %v551, %v692
      %v719 = vadd.f32 %v556, %v697
      %v720 = vadd.f32 %v561, %v702
      %v721 = vadd.f32 %v566, %v707
      %v722 = vadd.f32 %v571, %v712
      %v723 = vld [vmem:[%s574 + $0x1] sm:$0xff]
      %v724 = vld [vmem:[%s574 + $0x11] sm:$0xff]
      %v725 = vld [vmem:[%s574 + $0x21] sm:$0xff]
      %v726 = vld [vmem:[%s574 + $0x31] sm:$0xff]
      %v727 = vld [vmem:[%s574 + $0x41] sm:$0xff]
      %v728 = vld [vmem:[%s574 + $0x51] sm:$0xff]
      %v729 = vld [vmem:[%s574 + $0x61] sm:$0xff]
      %v730 = vld [vmem:[%s574 + $0x71] sm:$0xff]
      %s731 = scalar_lea.vmem %s2, 48
      %v732 = vld [vmem:[%s731] sm:$0xff]
      %v733 = vld [vmem:[%s731 + $0x8] sm:$0xff]
      %v735 = vsel %vm273, %v723, 0
      %v738 = vsel %vm273, %v724, 0
      %v741 = vsel %vm273, %v725, 0
      %v744 = vsel %vm273, %v726, 0
      %v747 = vsel %vm273, %v727, 0
      %v750 = vsel %vm273, %v728, 0
      %v753 = vsel %vm273, %v729, 0
      %v756 = vsel %vm273, %v730, 0
      %758 = vmatprep.subr.mxu0 0.0
      %759 = vmatpush1.msra.mxu0 %v732
      %760 = vmatprep.subr.mxu0 0.0
      %761 = vmatpush1.msra.mxu0 %v733
      %762 = vmatprep.subr.mxu0 0.0
      %763 = vmatpush1.msra.mxu0 0.0
      %764 = vmatprep.subr.mxu0 0.0
      %765 = vmatpush1.msra.mxu0 0.0
      %766 = vmatprep.subr.mxu0 0.0
      %767 = vmatpush1.msra.mxu0 0.0
      %768 = vmatprep.subr.mxu0 0.0
      %769 = vmatpush1.msra.mxu0 0.0
      %770 = vmatprep.subr.mxu0 0.0
      %771 = vmatpush1.msra.mxu0 0.0
      %772 = vmatprep.subr.mxu0 0.0
      %773 = vmatpush1.msra.mxu0 0.0
      %774 = vmatprep.subr.mxu0 0.0
      %775 = vmatpush1.msra.mxu0 0.0
      %776 = vmatprep.subr.mxu0 0.0
      %777 = vmatpush1.msra.mxu0 0.0
      %778 = vmatprep.subr.mxu0 0.0
      %779 = vmatpush1.msra.mxu0 0.0
      %780 = vmatprep.subr.mxu0 0.0
      %781 = vmatpush1.msra.mxu0 0.0
      %782 = vmatprep.subr.mxu0 0.0
      %783 = vmatpush1.msra.mxu0 0.0
      %784 = vmatprep.subr.mxu0 0.0
      %785 = vmatpush1.msra.mxu0 0.0
      %786 = vmatprep.subr.mxu0 0.0
      %787 = vmatpush1.msra.mxu0 0.0
      %788 = vmatprep.subr.mxu0 0.0
      %789 = vmatpush1.msra.mxu0 0.0
      %790 = vmatprep.subr.mxu0 0.0
      %791 = vmatpush1.msra.mxu0 0.0
      %792 = vmatprep.subr.mxu0 0.0
      %793 = vmatpush1.msra.mxu0 0.0
      %794 = vmatprep.subr.mxu0 0.0
      %795 = vmatpush1.msra.mxu0 0.0
      %796 = vmatprep.subr.mxu0 0.0
      %797 = vmatpush1.msra.mxu0 0.0
      %798 = vmatprep.subr.mxu0 0.0
      %799 = vmatpush1.msra.mxu0 0.0
      %800 = vmatprep.subr.mxu0 0.0
      %801 = vmatpush1.msra.mxu0 0.0
      %802 = vmatprep.subr.mxu0 0.0
      %803 = vmatpush1.msra.mxu0 0.0
      %804 = vmatprep.subr.mxu0 0.0
      %805 = vmatpush1.msra.mxu0 0.0
      %806 = vmatprep.subr.mxu0 0.0
      %807 = vmatpush1.msra.mxu0 0.0
      %808 = vmatprep.subr.mxu0 0.0
      %809 = vmatpush1.msra.mxu0 0.0
      %810 = vmatprep.subr.mxu0 0.0
      %811 = vmatpush1.msra.mxu0 0.0
      %812 = vmatprep.subr.mxu0 0.0
      %813 = vmatpush1.msra.mxu0 0.0
      %814 = vmatprep.subr.mxu0 0.0
      %815 = vmatpush1.msra.mxu0 0.0
      %816 = vmatprep.subr.mxu0 0.0
      %817 = vmatpush1.msra.mxu0 0.0
      %818 = vmatprep.subr.mxu0 0.0
      %819 = vmatpush1.msra.mxu0 0.0
      %820 = vmatprep.subr.mxu0 0.0
      %821 = vmatpush1.msra.mxu0 0.0
      %822 = vmatprep.mubr.f32.mxu0 0.0
      %823 = vmatmul.mubr.f32.gmra.mrb[0].mxu0 %v735
      %v824 = vpop.f32.mrb[0].mxu0
      %v825 = vadd.f32 0.0, %v824
      %v826 = vpop.f32.mrb[0].mxu0
      %827 = vmatprep.mubr.f32.mxu0 0.0
      %828 = vmatmul.mubr.f32.gmra.mrb[0].mxu0 %v738
      %v829 = vpop.f32.mrb[0].mxu0
      %v830 = vadd.f32 0.0, %v829
      %v831 = vpop.f32.mrb[0].mxu0
      %832 = vmatprep.mubr.f32.mxu0 0.0
      %833 = vmatmul.mubr.f32.gmra.mrb[0].mxu0 %v741
      %v834 = vpop.f32.mrb[0].mxu0
      %v835 = vadd.f32 0.0, %v834
      %v836 = vpop.f32.mrb[0].mxu0
      %837 = vmatprep.mubr.f32.mxu0 0.0
      %838 = vmatmul.mubr.f32.gmra.mrb[0].mxu0 %v744
      %v839 = vpop.f32.mrb[0].mxu0
      %v840 = vadd.f32 0.0, %v839
      %v841 = vpop.f32.mrb[0].mxu0
      %842 = vmatprep.mubr.f32.mxu0 0.0
      %843 = vmatmul.mubr.f32.gmra.mrb[0].mxu0 %v747
      %v844 = vpop.f32.mrb[0].mxu0
      %v845 = vadd.f32 0.0, %v844
      %v846 = vpop.f32.mrb[0].mxu0
      %847 = vmatprep.mubr.f32.mxu0 0.0
      %848 = vmatmul.mubr.f32.gmra.mrb[0].mxu0 %v750
      %v849 = vpop.f32.mrb[0].mxu0
      %v850 = vadd.f32 0.0, %v849
      %v851 = vpop.f32.mrb[0].mxu0
      %852 = vmatprep.mubr.f32.mxu0 0.0
      %853 = vmatmul.mubr.f32.gmra.mrb[0].mxu0 %v753
      %v854 = vpop.f32.mrb[0].mxu0
      %v855 = vadd.f32 0.0, %v854
      %v856 = vpop.f32.mrb[0].mxu0
      %857 = vmatprep.mubr.f32.mxu0 0.0
      %858 = vmatmul.mubr.f32.gmra.mrb[0].mxu0 %v756
      %v859 = vpop.f32.mrb[0].mxu0
      %v860 = vadd.f32 0.0, %v859
      %v861 = vpop.f32.mrb[0].mxu0
      %862 = vdwg.mxu0
      %v863 = vadd.f32 %v715, %v825
      %v864 = vadd.f32 %v716, %v830
      %v865 = vadd.f32 %v717, %v835
      %v866 = vadd.f32 %v718, %v840
      %v867 = vadd.f32 %v719, %v845
      %v868 = vadd.f32 %v720, %v850
      %v869 = vadd.f32 %v721, %v855
      %v870 = vadd.f32 %v722, %v860
      %v871 = vld [vmem:[%s3] sm:$0x1]
      %v873 = vlaneseq
      %v874 = vshrl.u32 %v873, 7
      %v875 = vsub.s32 0, %v874
      %v876 = vrot.slane %v871, %v875
      %v878 = vadd.f32 %v863, %v876
      %v879 = vadd.f32 %v864, %v876
      %v880 = vadd.f32 %v865, %v876
      %v881 = vadd.f32 %v866, %v876
      %v882 = vadd.f32 %v867, %v876
      %v883 = vadd.f32 %v868, %v876
      %v884 = vadd.f32 %v869, %v876
      %v885 = vadd.f32 %v870, %v876
      %vm886 = vcmask 31744
      %887 = vst.msk [vmem:[%s263] sm:$0xff] %vm886, %v878
      %888 = vst.msk [vmem:[%s263 + $0x8] sm:$0xff] %vm886, %v879
      %889 = vst.msk [vmem:[%s263 + $0x10] sm:$0xff] %vm886, %v880
      %890 = vst.msk [vmem:[%s263 + $0x18] sm:$0xff] %vm886, %v881
      %891 = vst.msk [vmem:[%s263 + $0x20] sm:$0xff] %vm886, %v882
      %892 = vst.msk [vmem:[%s263 + $0x28] sm:$0xff] %vm886, %v883
      %893 = vst.msk [vmem:[%s263 + $0x30] sm:$0xff] %vm886, %v884
      %894 = vst.msk [vmem:[%s263 + $0x38] sm:$0xff] %vm886, %v885
      %s895 = smul.u32 8, %s20
      %p896 = scmp.lt.s32.totalorder %s19, 1
      %s897 = scalar_select %p896, %s19, 1
      %p898 = scmp.lt.s32.totalorder %s895, 7
      %s899 = scalar_select %p898, %s895, 7
      %s900 = smul.addr %s897, 8
      %s901 = sadd.s32 %s899, %s900
      %s902 = smul.addr %s901, 8
      %s903 = scalar_lea.vmem %s4, %s902
      // Predicated region
      $region37: #{downsample_forward.1} parent=35 // pred_check
        %p904 = pneg %p145
      $region38: #{downsample_forward.1} parent=35 // pred_check_branch
        %906 = sbr.rel (%p904) target = $region40
      $region39: #{downsample_forward.1} parent=35 // pred_region
        %s907 = smul.u32 8, %s20
      $region40: #{downsample_forward.1} parent=35 // pred_fallthru
        _
    $region36: #{downsample_forward.1} parent=5 // pred_fallthru
      _
    %p908 = scmp.le.s32.totalorder 2, %s10
    // Predicated region
    $region41: #{downsample_forward.1} parent=5 // pred_check
      %p909 = pneg %p908
    $region42: #{downsample_forward.1} parent=5 // pred_check_branch
      %911 = sbr.rel (%p909) target = $region44
    $region43: #{downsample_forward.1} parent=5 // pred_region
      %s912 = ssub.s32 %s10, 2
      // Predicated region
      $region45: #{downsample_forward.1} parent=43 // pred_check
        %p913 = pneg %p151
      $region46: #{downsample_forward.1} parent=43 // pred_check_branch
        %915 = sbr.rel (%p913) target = $region48
      $region47: #{downsample_forward.1} parent=43 // pred_region
        %s916 = smul.u32 8, %s22
        %p917 = scmp.lt.s32.totalorder %s21, 1
        %s918 = scalar_select %p917, %s21, 1
        %p919 = scmp.lt.s32.totalorder %s916, 7
        %s920 = scalar_select %p919, %s916, 7
        %s921 = smul.addr %s918, 8
        %s922 = sadd.s32 %s920, %s921
        %s923 = smul.addr %s922, 8
        %s924 = scalar_lea.vmem %s4, %s923
      $region48: #{downsample_forward.1} parent=43 // pred_fallthru
        _
    $region44: #{downsample_forward.1} parent=5 // pred_fallthru
      _
  $region6: #{downsample_forward.1} parent=0 // loop_footer
    %s14 = sadd.s32 1, %s10
  $region7: #{downsample_forward.1} parent=0 // loop_footer_branch
    %9 = sbr.rel target = $region3
  $region8: #{downsample_forward.1} parent=0 // loop_exit
    _

</llo_original>
